<compile_context>
chip_gen: v5e
topology: v5e:2x2
jax: 0.10.0
libtpu: 0.0.40
codegen_flags: <defaults>
</compile_context>

<pallas_src>
import jax
import jax.numpy as jnp
from jax.experimental import pallas as pl
from jax.experimental.pallas import tpu as pltpu

K_IN = 832      # fc1 in_features
N_HID = 50      # fc1 out_features
K_PAD = 896     # 7 * 128 lanes (not 1024: avoids a dead MXU pass)
N_PAD = 128     # one full lane group


def mlp_kernel(x_ref, w1_ref, b1_ref, w2_ref, b2_ref, o_ref):
    # fc1 on the MXU: (Bp, 896) bf16 @ (896, 128) bf16 -> (Bp, 128) f32.
    h = jnp.dot(x_ref[...], w1_ref[...], preferred_element_type=jnp.float32)
    h = jnp.maximum(h + b1_ref[...], 0.0)                      # bias + ReLU (VPU)
    # fc2 as a lane reduction; padded lanes of w2_row are zero so they drop out.
    out = jnp.sum(h * w2_ref[...], axis=-1, keepdims=True)     # (Bp, 1)
    out = out + b2_ref[0, 0]                                    # SMEM scalar bias
    # Lane-dense (unmasked) store: broadcast per-row scalar across 128 lanes.
    o_ref[...] = jnp.broadcast_to(out, o_ref.shape)


def net_forward(x, w1, b1, w2, b2):
    """x: (B, C, H, W) float32 with C*H*W == 832. Returns (B, 1) float32."""
    B = x.shape[0]
    x_flat = x.reshape(B, -1)                                  # torch.flatten(x, 1)
    assert x_flat.shape[1] == K_IN

    # Pad batch to a sublane multiple so the output slab store is unmasked.
    B_PAD = ((B + 7) // 8) * 8

    # Zero-pad to lane-dense shapes; bf16 for the MXU operands, f32 elsewhere.
    x_p = jnp.pad(x_flat, ((0, B_PAD - B), (0, K_PAD - K_IN))).astype(jnp.bfloat16)
    w1_p = jnp.pad(w1, ((0, K_PAD - K_IN), (0, N_PAD - N_HID))).astype(jnp.bfloat16)
    b1_p = jnp.pad(b1, ((0, 0), (0, N_PAD - N_HID)))           # (1, 128) f32
    w2_row = jnp.pad(w2.T, ((0, 0), (0, N_PAD - N_HID)))       # (1, 128) f32

    # TODO(synk): if B grows (serving), add a batch grid with resident weights
    # and dimension_semantics=("parallel",) so v7x's 2 TensorCores split it.
    out = pl.pallas_call(
        mlp_kernel,
        out_shape=jax.ShapeDtypeStruct((B_PAD, N_PAD), jnp.float32),
        in_specs=[
            pl.BlockSpec(memory_space=pltpu.VMEM),   # x_p    (B_PAD, 896) bf16
            pl.BlockSpec(memory_space=pltpu.VMEM),   # w1_p   (896, 128)   bf16
            pl.BlockSpec(memory_space=pltpu.VMEM),   # b1_p   (1, 128)     f32
            pl.BlockSpec(memory_space=pltpu.VMEM),   # w2_row (1, 128)     f32
            pl.BlockSpec(memory_space=pltpu.SMEM),   # b2     (1, 1)       f32
        ],
        out_specs=pl.BlockSpec(memory_space=pltpu.VMEM),
    )(x_p, w1_p, b1_p, w2_row, b2)
    return out[:B, :1]


def init_params(key):
    """Deterministic init matching nn.Linear shapes.

    PyTorch stores fc.weight as (out_features, in_features); we keep the
    transposed (in, out) layout so the kernel does plain x @ W.
    """
    k1, k2, k3, k4 = jax.random.split(key, 4)
    in1, out1 = K_IN, N_HID
    in2, out2 = N_HID, 1
    lim1 = 1.0 / jnp.sqrt(in1)
    lim2 = 1.0 / jnp.sqrt(in2)
    w1 = jax.random.uniform(k1, (in1, out1), jnp.float32, -lim1, lim1)
    b1 = jax.random.uniform(k2, (1, out1), jnp.float32, -lim1, lim1)
    w2 = jax.random.uniform(k3, (in2, out2), jnp.float32, -lim2, lim2)
    b2 = jax.random.uniform(k4, (1, out2), jnp.float32, -lim2, lim2)
    return w1, b1, w2, b2


if __name__ == "__main__":
    key = jax.random.PRNGKey(0)
    k_x, k_p = jax.random.split(key)

    # Small input consistent with fc1 in_features=832: (B=2, C=13, H=8, W=8).
    x = jax.random.normal(k_x, (2, 13, 8, 8), dtype=jnp.float32)
    w1, b1, w2, b2 = init_params(k_p)

    fwd = jax.jit(net_forward)
    y = fwd(x, w1, b1, w2, b2)
    y = jax.block_until_ready(y)

    # Reference check in plain f32 JAX (bf16 MXU operands -> relaxed tolerance).
    x_flat = x.reshape(x.shape[0], -1)
    y_ref = jnp.maximum(x_flat @ w1 + b1, 0.0) @ w2 + b2
    assert y.shape == (2, 1)
    assert jnp.allclose(y, y_ref, atol=2e-2, rtol=2e-2), (y, y_ref)

    print("KERNEL_OK")
</pallas_src>

<mosaic_0001>
module attributes {stable_mosaic.version = 11 : i64} {
  func.func @mlp_kernel(%arg0: memref<8x896xbf16, #tpu.memory_space<vmem>>, %arg1: memref<896x128xbf16, #tpu.memory_space<vmem>>, %arg2: memref<1x128xf32, #tpu.memory_space<vmem>>, %arg3: memref<1x128xf32, #tpu.memory_space<vmem>>, %arg4: memref<1x1xf32, #tpu.memory_space<smem>>, %arg5: memref<8x128xf32, #tpu.memory_space<vmem>>) attributes {dimension_semantics = [], scalar_prefetch = 0 : i64, scratch_operands = 0 : i64, tpu.core_type = #tpu.core_type<tc>} {
    %c0 = arith.constant 0 : index
    %c0_0 = arith.constant 0 : index
    %0 = vector.load %arg0[%c0, %c0_0] : memref<8x896xbf16, #tpu.memory_space<vmem>>, vector<8x896xbf16>
    %c0_1 = arith.constant 0 : index
    %c0_2 = arith.constant 0 : index
    %1 = vector.load %arg1[%c0_1, %c0_2] : memref<896x128xbf16, #tpu.memory_space<vmem>>, vector<896x128xbf16>
    %cst = arith.constant dense<0.000000e+00> : vector<8x128xf32>
    %2 = tpu.matmul %0, %1, %cst {dimension_numbers = #tpu.dot_dimension_numbers<[1], [0], [0], [1], [0, 0, 1, 1], [], []>} : vector<8x896xbf16>, vector<896x128xbf16>, vector<8x128xf32> -> vector<8x128xf32>
    %c0_3 = arith.constant 0 : index
    %c0_4 = arith.constant 0 : index
    %3 = vector.load %arg2[%c0_3, %c0_4] : memref<1x128xf32, #tpu.memory_space<vmem>>, vector<1x128xf32>
    %4 = vector.broadcast %3 : vector<1x128xf32> to vector<8x128xf32>
    %5 = arith.addf %2, %4 : vector<8x128xf32>
    %cst_5 = arith.constant 0.000000e+00 : f32
    %6 = vector.broadcast %cst_5 : f32 to vector<8x128xf32>
    %7 = arith.maximumf %5, %6 : vector<8x128xf32>
    %c0_6 = arith.constant 0 : index
    %c0_7 = arith.constant 0 : index
    %8 = vector.load %arg3[%c0_6, %c0_7] : memref<1x128xf32, #tpu.memory_space<vmem>>, vector<1x128xf32>
    %9 = vector.broadcast %8 : vector<1x128xf32> to vector<8x128xf32>
    %10 = arith.mulf %7, %9 : vector<8x128xf32>
    %cst_8 = arith.constant dense<0.000000e+00> : vector<8xf32>
    %11 = vector.multi_reduction <add>, %10, %cst_8 [1] : vector<8x128xf32> to vector<8xf32>
    %12 = vector.shape_cast %11 : vector<8xf32> to vector<8x1xf32>
    %c0_9 = arith.constant 0 : index
    %c0_10 = arith.constant 0 : index
    %13 = memref.load %arg4[%c0_9, %c0_10] : memref<1x1xf32, #tpu.memory_space<smem>>
    %14 = vector.broadcast %13 : f32 to vector<8x1xf32>
    %15 = arith.addf %12, %14 : vector<8x1xf32>
    %16 = vector.shape_cast %15 : vector<8x1xf32> to vector<8x1xf32>
    %17 = vector.broadcast %16 : vector<8x1xf32> to vector<8x128xf32>
    %c0_11 = arith.constant 0 : index
    %c0_12 = arith.constant 0 : index
    %18 = vector.load %arg5[%c0_11, %c0_12] : memref<8x128xf32, #tpu.memory_space<vmem>>, vector<8x128xf32>
    tpu.vector_store %arg5[%c0_11, %c0_12], %17 {strides = array<i32>} : memref<8x128xf32, #tpu.memory_space<vmem>>, vector<8x128xf32>,
    return
  }
}

</mosaic_0001>

<llo_original>
// kernel: net_forward.1
$region0: #{net_forward.1}
  #allocation0 [shape = 'u32[]', space=smem, size = 0x4, offset = 0x4, fixed_abs, tag = 'smem constant byte address 0x4 - core index']
  #allocation1 [shape = 'u32[72,128]{1,0:T(1,128)}', space=vmem, size = 0x9000, scoped, tag = 'internal scratch']
  #allocation2 [shape = 'f32[1,1]{1,0:T(1,128)S(6)}', space=smem, size = 0x200, scoped, tag = 'scoped memory for net_forward.1']
  %s0 = inlined_call_operand.vmem [shape: bf16[8,896], index: 0, kind: input, shape index: {}]
  %s1 = inlined_call_operand.vmem [shape: bf16[896,128], index: 1, kind: input, shape index: {}]
  %s2 = inlined_call_operand.vmem [shape: f32[1,128], index: 2, kind: input, shape index: {}]
  %s3 = inlined_call_operand.vmem [shape: f32[1,128], index: 3, kind: input, shape index: {}]
  %s4 = inlined_call_operand.<no memory space> [shape: f32[1,1], index: 4, kind: input, shape index: {}]
  %s5 = inlined_call_operand.vmem [shape: f32[8,128], index: 5, kind: output, shape index: {}]
  %s6 = sld [smem:[#allocation0]]
  $region30: #{net_forward.1} parent=0
    _
  %s8 = ssub.s32 1, %s6
  %s9 = scalar_select 0, %s8, %s6
  %10 = sst [smem:[#allocation2]] %s4
  // Predicated region
  $region2: #{net_forward.1} parent=0 // pred_check
    _
  $region3: #{net_forward.1} parent=0 // pred_check_branch
    %12 = sbr.rel (0) target = $region5
  $region4: #{net_forward.1} parent=0 // pred_region
    _
  $region5: #{net_forward.1} parent=0 // pred_fallthru
    _
  // Predicated region
  $region6: #{net_forward.1} parent=0 // pred_check
    _
  $region7: #{net_forward.1} parent=0 // pred_check_branch
    %14 = sbr.rel (0) target = $region9
  $region8: #{net_forward.1} parent=0 // pred_region
    _
  $region9: #{net_forward.1} parent=0 // pred_fallthru
    _
  // Predicated region
  $region10: #{net_forward.1} parent=0 // pred_check
    _
  $region11: #{net_forward.1} parent=0 // pred_check_branch
    %16 = sbr.rel (0) target = $region13
  $region12: #{net_forward.1} parent=0 // pred_region
    _
  $region13: #{net_forward.1} parent=0 // pred_fallthru
    _
  // Predicated region
  $region14: #{net_forward.1} parent=0 // pred_check
    _
  $region15: #{net_forward.1} parent=0 // pred_check_branch
    %18 = sbr.rel (0) target = $region17
  $region16: #{net_forward.1} parent=0 // pred_region
    _
  $region17: #{net_forward.1} parent=0 // pred_fallthru
    _
  // Predicated region
  $region18: #{net_forward.1} parent=0 // pred_check
    _
  $region19: #{net_forward.1} parent=0 // pred_check_branch
    %20 = sbr.rel (0) target = $region21
  $region20: #{net_forward.1} parent=0 // pred_region
    _
  $region21: #{net_forward.1} parent=0 // pred_fallthru
    _
  %v21 = vld [vmem:[%s0] sm:$0xff]
  %v22 = vld [vmem:[%s0 + $0x8] sm:$0xff]
  %v23 = vld [vmem:[%s0 + $0x10] sm:$0xff]
  %v24 = vld [vmem:[%s0 + $0x18] sm:$0xf]
  %v25 = vld [vmem:[%s1] sm:$0xf]
  %v26 = vld [vmem:[%s1 + $0x4] sm:$0xf]
  %v27 = vld [vmem:[%s1 + $0x8] sm:$0xf]
  %v28 = vld [vmem:[%s1 + $0xc] sm:$0xf]
  %v29 = vld [vmem:[%s1 + $0x10] sm:$0xf]
  %v30 = vld [vmem:[%s1 + $0x14] sm:$0xf]
  %v31 = vld [vmem:[%s1 + $0x18] sm:$0xf]
  %v32 = vld [vmem:[%s1 + $0x1c] sm:$0xf]
  %v33 = vld [vmem:[%s1 + $0x20] sm:$0xf]
  %v34 = vld [vmem:[%s1 + $0x24] sm:$0xf]
  %v35 = vld [vmem:[%s1 + $0x28] sm:$0xf]
  %v36 = vld [vmem:[%s1 + $0x2c] sm:$0xf]
  %v37 = vld [vmem:[%s1 + $0x30] sm:$0xf]
  %v38 = vld [vmem:[%s1 + $0x34] sm:$0xf]
  %v39 = vld [vmem:[%s1 + $0x38] sm:$0xf]
  %v40 = vld [vmem:[%s1 + $0x3c] sm:$0xf]
  %v41 = vld [vmem:[%s1 + $0x40] sm:$0xf]
  %v42 = vld [vmem:[%s1 + $0x44] sm:$0xf]
  %v43 = vld [vmem:[%s1 + $0x48] sm:$0xf]
  %v44 = vld [vmem:[%s1 + $0x4c] sm:$0xf]
  %v45 = vld [vmem:[%s1 + $0x50] sm:$0xf]
  %v46 = vld [vmem:[%s1 + $0x54] sm:$0xf]
  %v47 = vld [vmem:[%s1 + $0x58] sm:$0xf]
  %v48 = vld [vmem:[%s1 + $0x5c] sm:$0xf]
  %v49 = vld [vmem:[%s1 + $0x60] sm:$0xf]
  %v50 = vld [vmem:[%s1 + $0x64] sm:$0xf]
  %v51 = vld [vmem:[%s1 + $0x68] sm:$0xf]
  %v52 = vld [vmem:[%s1 + $0x6c] sm:$0xf]
  %v53 = vld [vmem:[%s1 + $0x70] sm:$0xf]
  %v54 = vld [vmem:[%s1 + $0x74] sm:$0xf]
  %v55 = vld [vmem:[%s1 + $0x78] sm:$0xf]
  %v56 = vld [vmem:[%s1 + $0x7c] sm:$0xf]
  %v57 = vld [vmem:[%s1 + $0x80] sm:$0xf]
  %v58 = vld [vmem:[%s1 + $0x84] sm:$0xf]
  %v59 = vld [vmem:[%s1 + $0x88] sm:$0xf]
  %v60 = vld [vmem:[%s1 + $0x8c] sm:$0xf]
  %v61 = vld [vmem:[%s1 + $0x90] sm:$0xf]
  %v62 = vld [vmem:[%s1 + $0x94] sm:$0xf]
  %v63 = vld [vmem:[%s1 + $0x98] sm:$0xf]
  %v64 = vld [vmem:[%s1 + $0x9c] sm:$0xf]
  %v65 = vld [vmem:[%s1 + $0xa0] sm:$0xf]
  %v66 = vld [vmem:[%s1 + $0xa4] sm:$0xf]
  %v67 = vld [vmem:[%s1 + $0xa8] sm:$0xf]
  %v68 = vld [vmem:[%s1 + $0xac] sm:$0xf]
  %v69 = vld [vmem:[%s1 + $0xb0] sm:$0xf]
  %v70 = vld [vmem:[%s1 + $0xb4] sm:$0xf]
  %v71 = vld [vmem:[%s1 + $0xb8] sm:$0xf]
  %v72 = vld [vmem:[%s1 + $0xbc] sm:$0xf]
  %v73 = vld [vmem:[%s1 + $0xc0] sm:$0xf]
  %v74 = vld [vmem:[%s1 + $0xc4] sm:$0xf]
  %v75 = vld [vmem:[%s1 + $0xc8] sm:$0xf]
  %v76 = vld [vmem:[%s1 + $0xcc] sm:$0xf]
  %v77 = vld [vmem:[%s1 + $0xd0] sm:$0xf]
  %v78 = vld [vmem:[%s1 + $0xd4] sm:$0xf]
  %v79 = vld [vmem:[%s1 + $0xd8] sm:$0xf]
  %v80 = vld [vmem:[%s1 + $0xdc] sm:$0xf]
  %v81 = vld [vmem:[%s1 + $0xe0] sm:$0xf]
  %v82 = vld [vmem:[%s1 + $0xe4] sm:$0xf]
  %v83 = vld [vmem:[%s1 + $0xe8] sm:$0xf]
  %v84 = vld [vmem:[%s1 + $0xec] sm:$0xf]
  %v85 = vld [vmem:[%s1 + $0xf0] sm:$0xf]
  %v86 = vld [vmem:[%s1 + $0xf4] sm:$0xf]
  %v87 = vld [vmem:[%s1 + $0xf8] sm:$0xf]
  %v88 = vld [vmem:[%s1 + $0xfc] sm:$0xf]
  %v89 = vld [vmem:[%s1 + $0x100] sm:$0xf]
  %v90 = vld [vmem:[%s1 + $0x104] sm:$0xf]
  %v91 = vld [vmem:[%s1 + $0x108] sm:$0xf]
  %v92 = vld [vmem:[%s1 + $0x10c] sm:$0xf]
  %v93 = vld [vmem:[%s1 + $0x110] sm:$0xf]
  %v94 = vld [vmem:[%s1 + $0x114] sm:$0xf]
  %v95 = vld [vmem:[%s1 + $0x118] sm:$0xf]
  %v96 = vld [vmem:[%s1 + $0x11c] sm:$0xf]
  %v97 = vld [vmem:[%s1 + $0x120] sm:$0xf]
  %v98 = vld [vmem:[%s1 + $0x124] sm:$0xf]
  %v99 = vld [vmem:[%s1 + $0x128] sm:$0xf]
  %v100 = vld [vmem:[%s1 + $0x12c] sm:$0xf]
  %v101 = vld [vmem:[%s1 + $0x130] sm:$0xf]
  %v102 = vld [vmem:[%s1 + $0x134] sm:$0xf]
  %v103 = vld [vmem:[%s1 + $0x138] sm:$0xf]
  %v104 = vld [vmem:[%s1 + $0x13c] sm:$0xf]
  %v105 = vld [vmem:[%s1 + $0x140] sm:$0xf]
  %v106 = vld [vmem:[%s1 + $0x144] sm:$0xf]
  %v107 = vld [vmem:[%s1 + $0x148] sm:$0xf]
  %v108 = vld [vmem:[%s1 + $0x14c] sm:$0xf]
  %v109 = vld [vmem:[%s1 + $0x150] sm:$0xf]
  %v110 = vld [vmem:[%s1 + $0x154] sm:$0xf]
  %v111 = vld [vmem:[%s1 + $0x158] sm:$0xf]
  %v112 = vld [vmem:[%s1 + $0x15c] sm:$0xf]
  %v113 = vld [vmem:[%s1 + $0x160] sm:$0xf]
  %v114 = vld [vmem:[%s1 + $0x164] sm:$0xf]
  %v115 = vld [vmem:[%s1 + $0x168] sm:$0xf]
  %v116 = vld [vmem:[%s1 + $0x16c] sm:$0xf]
  %v117 = vld [vmem:[%s1 + $0x170] sm:$0xf]
  %v118 = vld [vmem:[%s1 + $0x174] sm:$0xf]
  %v119 = vld [vmem:[%s1 + $0x178] sm:$0xf]
  %v120 = vld [vmem:[%s1 + $0x17c] sm:$0xf]
  %v121 = vld [vmem:[%s1 + $0x180] sm:$0xf]
  %v122 = vld [vmem:[%s1 + $0x184] sm:$0xf]
  %v123 = vld [vmem:[%s1 + $0x188] sm:$0xf]
  %v124 = vld [vmem:[%s1 + $0x18c] sm:$0xf]
  %v125 = vld [vmem:[%s1 + $0x190] sm:$0xf]
  %v126 = vld [vmem:[%s1 + $0x194] sm:$0xf]
  %v127 = vld [vmem:[%s1 + $0x198] sm:$0xf]
  %v128 = vld [vmem:[%s1 + $0x19c] sm:$0xf]
  %v129 = vld [vmem:[%s1 + $0x1a0] sm:$0xf]
  %v130 = vld [vmem:[%s1 + $0x1a4] sm:$0xf]
  %v131 = vld [vmem:[%s1 + $0x1a8] sm:$0xf]
  %v132 = vld [vmem:[%s1 + $0x1ac] sm:$0xf]
  %v133 = vld [vmem:[%s1 + $0x1b0] sm:$0xf]
  %v134 = vld [vmem:[%s1 + $0x1b4] sm:$0xf]
  %v135 = vld [vmem:[%s1 + $0x1b8] sm:$0xf]
  %v136 = vld [vmem:[%s1 + $0x1bc] sm:$0xf]
  %v137 = vld [vmem:[%s2] sm:$0x1]
  %v139 = vperm.slane %v137, 0
  %v145 = vunpack.c.l.b16 %v21
  %v146 = vunpack.c.h.b16 %v21
  %v147 = vunpack.c.l.b16 %v22
  %v148 = vunpack.c.h.b16 %v22
  %v149 = vunpack.c.l.b16 %v23
  %v150 = vunpack.c.h.b16 %v23
  %v151 = vunpack.c.l.b16 %v24
  %v152 = vpack.c.b16 %v145, %v145
  %v153 = vpack.c.b16 %v146, %v146
  %v154 = vpack.c.b16 %v147, %v147
  %v155 = vpack.c.b16 %v148, %v148
  %v156 = vpack.c.b16 %v149, %v149
  %v157 = vpack.c.b16 %v150, %v150
  %v158 = vpack.c.b16 %v151, %v151
  %v278 = vunpack.c.l.b16 %v25
  %v279 = vunpack.c.l.b16 %v26
  %v280 = vunpack.c.l.b16 %v27
  %v281 = vunpack.c.l.b16 %v28
  %v282 = vunpack.c.l.b16 %v29
  %v283 = vunpack.c.l.b16 %v30
  %v284 = vunpack.c.l.b16 %v31
  %v285 = vunpack.c.l.b16 %v32
  %v286 = vunpack.c.l.b16 %v33
  %v287 = vunpack.c.l.b16 %v34
  %v288 = vunpack.c.l.b16 %v35
  %v289 = vunpack.c.l.b16 %v36
  %v290 = vunpack.c.l.b16 %v37
  %v291 = vunpack.c.l.b16 %v38
  %v292 = vunpack.c.l.b16 %v39
  %v293 = vunpack.c.l.b16 %v40
  %v294 = vunpack.c.l.b16 %v41
  %v295 = vunpack.c.l.b16 %v42
  %v296 = vunpack.c.l.b16 %v43
  %v297 = vunpack.c.l.b16 %v44
  %v298 = vunpack.c.l.b16 %v45
  %v299 = vunpack.c.l.b16 %v46
  %v300 = vunpack.c.l.b16 %v47
  %v301 = vunpack.c.l.b16 %v48
  %v302 = vunpack.c.l.b16 %v49
  %v303 = vunpack.c.l.b16 %v50
  %v304 = vunpack.c.l.b16 %v51
  %v305 = vunpack.c.l.b16 %v52
  %v306 = vunpack.c.l.b16 %v53
  %v307 = vunpack.c.l.b16 %v54
  %v308 = vunpack.c.l.b16 %v55
  %v309 = vunpack.c.l.b16 %v56
  %v310 = vunpack.c.l.b16 %v57
  %v311 = vunpack.c.l.b16 %v58
  %v312 = vunpack.c.l.b16 %v59
  %v313 = vunpack.c.l.b16 %v60
  %v314 = vunpack.c.l.b16 %v61
  %v315 = vunpack.c.l.b16 %v62
  %v316 = vunpack.c.l.b16 %v63
  %v317 = vunpack.c.l.b16 %v64
  %v318 = vunpack.c.l.b16 %v65
  %v319 = vunpack.c.l.b16 %v66
  %v320 = vunpack.c.l.b16 %v67
  %v321 = vunpack.c.l.b16 %v68
  %v322 = vunpack.c.l.b16 %v69
  %v323 = vunpack.c.l.b16 %v70
  %v324 = vunpack.c.l.b16 %v71
  %v325 = vunpack.c.l.b16 %v72
  %v326 = vunpack.c.l.b16 %v73
  %v327 = vunpack.c.l.b16 %v74
  %v328 = vunpack.c.l.b16 %v75
  %v329 = vunpack.c.l.b16 %v76
  %v330 = vunpack.c.l.b16 %v77
  %v331 = vunpack.c.l.b16 %v78
  %v332 = vunpack.c.l.b16 %v79
  %v333 = vunpack.c.l.b16 %v80
  %v334 = vunpack.c.l.b16 %v81
  %v335 = vunpack.c.l.b16 %v82
  %v336 = vunpack.c.l.b16 %v83
  %v337 = vunpack.c.l.b16 %v84
  %v338 = vunpack.c.l.b16 %v85
  %v339 = vunpack.c.l.b16 %v86
  %v340 = vunpack.c.l.b16 %v87
  %v341 = vunpack.c.l.b16 %v88
  %v342 = vunpack.c.l.b16 %v89
  %v343 = vunpack.c.l.b16 %v90
  %v344 = vunpack.c.l.b16 %v91
  %v345 = vunpack.c.l.b16 %v92
  %v346 = vunpack.c.l.b16 %v93
  %v347 = vunpack.c.l.b16 %v94
  %v348 = vunpack.c.l.b16 %v95
  %v349 = vunpack.c.l.b16 %v96
  %v350 = vunpack.c.l.b16 %v97
  %v351 = vunpack.c.l.b16 %v98
  %v352 = vunpack.c.l.b16 %v99
  %v353 = vunpack.c.l.b16 %v100
  %v354 = vunpack.c.l.b16 %v101
  %v355 = vunpack.c.l.b16 %v102
  %v356 = vunpack.c.l.b16 %v103
  %v357 = vunpack.c.l.b16 %v104
  %v358 = vunpack.c.l.b16 %v105
  %v359 = vunpack.c.l.b16 %v106
  %v360 = vunpack.c.l.b16 %v107
  %v361 = vunpack.c.l.b16 %v108
  %v362 = vunpack.c.l.b16 %v109
  %v363 = vunpack.c.l.b16 %v110
  %v364 = vunpack.c.l.b16 %v111
  %v365 = vunpack.c.l.b16 %v112
  %v366 = vunpack.c.l.b16 %v113
  %v367 = vunpack.c.l.b16 %v114
  %v368 = vunpack.c.l.b16 %v115
  %v369 = vunpack.c.l.b16 %v116
  %v370 = vunpack.c.l.b16 %v117
  %v371 = vunpack.c.l.b16 %v118
  %v372 = vunpack.c.l.b16 %v119
  %v373 = vunpack.c.l.b16 %v120
  %v374 = vunpack.c.l.b16 %v121
  %v375 = vunpack.c.l.b16 %v122
  %v376 = vunpack.c.l.b16 %v123
  %v377 = vunpack.c.l.b16 %v124
  %v378 = vunpack.c.l.b16 %v125
  %v379 = vunpack.c.l.b16 %v126
  %v380 = vunpack.c.l.b16 %v127
  %v381 = vunpack.c.l.b16 %v128
  %v382 = vunpack.c.l.b16 %v129
  %v383 = vunpack.c.l.b16 %v130
  %v384 = vunpack.c.l.b16 %v131
  %v385 = vunpack.c.l.b16 %v132
  %v386 = vunpack.c.l.b16 %v133
  %v387 = vunpack.c.l.b16 %v134
  %v388 = vunpack.c.l.b16 %v135
  %v389 = vunpack.c.l.b16 %v136
  %v390 = vpack.c.b16 %v279, %v278
  %v391 = vpack.c.b16 %v281, %v280
  %v392 = vpack.c.b16 %v283, %v282
  %v393 = vpack.c.b16 %v285, %v284
  %v394 = vpack.c.b16 %v287, %v286
  %v395 = vpack.c.b16 %v289, %v288
  %v396 = vpack.c.b16 %v291, %v290
  %v397 = vpack.c.b16 %v293, %v292
  %v398 = vpack.c.b16 %v295, %v294
  %v399 = vpack.c.b16 %v297, %v296
  %v400 = vpack.c.b16 %v299, %v298
  %v401 = vpack.c.b16 %v301, %v300
  %v402 = vpack.c.b16 %v303, %v302
  %v403 = vpack.c.b16 %v305, %v304
  %v404 = vpack.c.b16 %v307, %v306
  %v405 = vpack.c.b16 %v309, %v308
  %v406 = vpack.c.b16 %v311, %v310
  %v407 = vpack.c.b16 %v313, %v312
  %v408 = vpack.c.b16 %v315, %v314
  %v409 = vpack.c.b16 %v317, %v316
  %v410 = vpack.c.b16 %v319, %v318
  %v411 = vpack.c.b16 %v321, %v320
  %v412 = vpack.c.b16 %v323, %v322
  %v413 = vpack.c.b16 %v325, %v324
  %v414 = vpack.c.b16 %v327, %v326
  %v415 = vpack.c.b16 %v329, %v328
  %v416 = vpack.c.b16 %v331, %v330
  %v417 = vpack.c.b16 %v333, %v332
  %v418 = vpack.c.b16 %v335, %v334
  %v419 = vpack.c.b16 %v337, %v336
  %v420 = vpack.c.b16 %v339, %v338
  %v421 = vpack.c.b16 %v341, %v340
  %v422 = vpack.c.b16 %v343, %v342
  %v423 = vpack.c.b16 %v345, %v344
  %v424 = vpack.c.b16 %v347, %v346
  %v425 = vpack.c.b16 %v349, %v348
  %v426 = vpack.c.b16 %v351, %v350
  %v427 = vpack.c.b16 %v353, %v352
  %v428 = vpack.c.b16 %v355, %v354
  %v429 = vpack.c.b16 %v357, %v356
  %v430 = vpack.c.b16 %v359, %v358
  %v431 = vpack.c.b16 %v361, %v360
  %v432 = vpack.c.b16 %v363, %v362
  %v433 = vpack.c.b16 %v365, %v364
  %v434 = vpack.c.b16 %v367, %v366
  %v435 = vpack.c.b16 %v369, %v368
  %v436 = vpack.c.b16 %v371, %v370
  %v437 = vpack.c.b16 %v373, %v372
  %v438 = vpack.c.b16 %v375, %v374
  %v439 = vpack.c.b16 %v377, %v376
  %v440 = vpack.c.b16 %v379, %v378
  %v441 = vpack.c.b16 %v381, %v380
  %v442 = vpack.c.b16 %v383, %v382
  %v443 = vpack.c.b16 %v385, %v384
  %v444 = vpack.c.b16 %v387, %v386
  %v445 = vpack.c.b16 %v389, %v388
  %502 = vmatpush.bf16.msra.mxu0 %v397
  %503 = vmatpush.bf16.msra.mxu0 %v396
  %504 = vmatpush.bf16.msra.mxu0 %v395
  %505 = vmatpush.bf16.msra.mxu0 %v394
  %506 = vmatpush.bf16.msra.mxu0 %v393
  %507 = vmatpush.bf16.msra.mxu0 %v392
  %508 = vmatpush.bf16.msra.mxu0 %v391
  %509 = vmatpush.bf16.msra.mxu0 %v390
  %510 = vmatmul.bf16.gmra.mxu0 %v152
  %v511 = vpop.f32.mrf.mxu0
  %v512 = vadd.f32 %v139, %v511
  %v513 = vpop.f32.mrf.mxu0
  %514 = vdwg.mxu0
  %515 = vmatpush.bf16.msra.mxu0 %v405
  %516 = vmatpush.bf16.msra.mxu0 %v404
  %517 = vmatpush.bf16.msra.mxu0 %v403
  %518 = vmatpush.bf16.msra.mxu0 %v402
  %519 = vmatpush.bf16.msra.mxu0 %v401
  %520 = vmatpush.bf16.msra.mxu0 %v400
  %521 = vmatpush.bf16.msra.mxu0 %v399
  %522 = vmatpush.bf16.msra.mxu0 %v398
  %523 = vmatmul.bf16.gmra.mxu0 %v153
  %v524 = vpop.f32.mrf.mxu0
  %v525 = vadd.f32 %v512, %v524
  %v526 = vpop.f32.mrf.mxu0
  %527 = vdwg.mxu0
  %528 = vmatpush.bf16.msra.mxu0 %v413
  %529 = vmatpush.bf16.msra.mxu0 %v412
  %530 = vmatpush.bf16.msra.mxu0 %v411
  %531 = vmatpush.bf16.msra.mxu0 %v410
  %532 = vmatpush.bf16.msra.mxu0 %v409
  %533 = vmatpush.bf16.msra.mxu0 %v408
  %534 = vmatpush.bf16.msra.mxu0 %v407
  %535 = vmatpush.bf16.msra.mxu0 %v406
  %536 = vmatmul.bf16.gmra.mxu0 %v154
  %v537 = vpop.f32.mrf.mxu0
  %v538 = vadd.f32 %v525, %v537
  %v539 = vpop.f32.mrf.mxu0
  %540 = vdwg.mxu0
  %541 = vmatpush.bf16.msra.mxu0 %v421
  %542 = vmatpush.bf16.msra.mxu0 %v420
  %543 = vmatpush.bf16.msra.mxu0 %v419
  %544 = vmatpush.bf16.msra.mxu0 %v418
  %545 = vmatpush.bf16.msra.mxu0 %v417
  %546 = vmatpush.bf16.msra.mxu0 %v416
  %547 = vmatpush.bf16.msra.mxu0 %v415
  %548 = vmatpush.bf16.msra.mxu0 %v414
  %549 = vmatmul.bf16.gmra.mxu0 %v155
  %v550 = vpop.f32.mrf.mxu0
  %v551 = vadd.f32 %v538, %v550
  %v552 = vpop.f32.mrf.mxu0
  %553 = vdwg.mxu0
  %554 = vmatpush.bf16.msra.mxu0 %v429
  %555 = vmatpush.bf16.msra.mxu0 %v428
  %556 = vmatpush.bf16.msra.mxu0 %v427
  %557 = vmatpush.bf16.msra.mxu0 %v426
  %558 = vmatpush.bf16.msra.mxu0 %v425
  %559 = vmatpush.bf16.msra.mxu0 %v424
  %560 = vmatpush.bf16.msra.mxu0 %v423
  %561 = vmatpush.bf16.msra.mxu0 %v422
  %562 = vmatmul.bf16.gmra.mxu0 %v156
  %v563 = vpop.f32.mrf.mxu0
  %v564 = vadd.f32 %v551, %v563
  %v565 = vpop.f32.mrf.mxu0
  %566 = vdwg.mxu0
  %567 = vmatpush.bf16.msra.mxu0 %v437
  %568 = vmatpush.bf16.msra.mxu0 %v436
  %569 = vmatpush.bf16.msra.mxu0 %v435
  %570 = vmatpush.bf16.msra.mxu0 %v434
  %571 = vmatpush.bf16.msra.mxu0 %v433
  %572 = vmatpush.bf16.msra.mxu0 %v432
  %573 = vmatpush.bf16.msra.mxu0 %v431
  %574 = vmatpush.bf16.msra.mxu0 %v430
  %575 = vmatmul.bf16.gmra.mxu0 %v157
  %v576 = vpop.f32.mrf.mxu0
  %v577 = vadd.f32 %v564, %v576
  %v578 = vpop.f32.mrf.mxu0
  %579 = vdwg.mxu0
  %580 = vmatpush.bf16.msra.mxu0 %v445
  %581 = vmatpush.bf16.msra.mxu0 %v444
  %582 = vmatpush.bf16.msra.mxu0 %v443
  %583 = vmatpush.bf16.msra.mxu0 %v442
  %584 = vmatpush.bf16.msra.mxu0 %v441
  %585 = vmatpush.bf16.msra.mxu0 %v440
  %586 = vmatpush.bf16.msra.mxu0 %v439
  %587 = vmatpush.bf16.msra.mxu0 %v438
  %588 = vmatmul.bf16.gmra.mxu0 %v158
  %v589 = vpop.f32.mrf.mxu0
  %v590 = vadd.f32 %v577, %v589
  %v591 = vpop.f32.mrf.mxu0
  %592 = vdwg.mxu0
  %v593 = vmax.f32 %v590, 0.0
  %v594 = vld [vmem:[%s3] sm:$0x1]
  %v596 = vperm.slane %v594, 0
  %v598 = vmul.f32 %v593, %v596
  %599 = vadd.xlane.f32.xlu0 %v598
  %v600 = vpop.xlane.xlu0 %599
  %s601 = sld [smem:[#allocation2]]
  %v602 = vstv %s601
  %v603 = vadd.f32 %v600, %v602
  %604 = vst [vmem:[%s5] sm:$0xff] %v603
  // Predicated region
  $region22: #{net_forward.1} parent=0 // pred_check
    _
  $region23: #{net_forward.1} parent=0 // pred_check_branch
    %606 = sbr.rel (0) target = $region25
  $region24: #{net_forward.1} parent=0 // pred_region
    _
  $region25: #{net_forward.1} parent=0 // pred_fallthru
    _
  // Predicated region
  $region26: #{net_forward.1} parent=0 // pred_check
    _
  $region27: #{net_forward.1} parent=0 // pred_check_branch
    %608 = sbr.rel (0) target = $region29
  $region28: #{net_forward.1} parent=0 // pred_region
    _
  $region29: #{net_forward.1} parent=0 // pred_fallthru
    _

</llo_original>
